<compile_context>
chip_gen: v7x
topology: tpu7x:2x2x1
jax: 0.10.0
libtpu: 0.0.40
codegen_flags: <defaults>
</compile_context>

<pallas_src>
import jax
import jax.numpy as jnp
from jax.experimental import pallas as pl
from jax.experimental.pallas import tpu as pltpu

BN_EPS = 1e-5


def _round_up(a, b):
    return ((a + b - 1) // b) * b


def s_net_kernel(x_ref, w1_ref, b1_ref, w2_ref, b2_ref, w3_ref, b3_ref, s_ref):
    # x_ref: (tile_n, D), fed untransposed.  Contract the feature dim of both
    # operands so the MXU consumes x^T directly; the result and everything
    # downstream is lane-dense (H, tile_n).
    t = jnp.einsum("hd,td->ht", w1_ref[...], x_ref[...],
                   preferred_element_type=jnp.float32) + b1_ref[...]
    t = jnp.tanh(t)          # BN + sigmoid affine constants folded into W1/b1
    # (dropout: identity in eval mode)

    t = jnp.dot(w2_ref[...], t, preferred_element_type=jnp.float32) + b2_ref[...]
    t = jnp.tanh(t)          # BN + sigmoid affine constants folded into W2/b2
    # (dropout: identity in eval mode)

    z = jnp.dot(w3_ref[...], t, preferred_element_type=jnp.float32) + b3_ref[...]
    s_ref[...] = jnp.exp(z)  # S, lane-dense (1, tile_n)


def _fold_bn(w, b, gamma, beta, mean, var, eps=BN_EPS):
    """Fold eval-mode BatchNorm1d (running stats) into a preceding Linear.

    w: (out, in); b/gamma/beta/mean/var: (out,).  Numerically identical to
    BN(eval)(Linear(x)) = scale*(W x + b - mean) + beta, scale = gamma/sqrt(var+eps).
    """
    scale = gamma * jax.lax.rsqrt(var + eps)
    return w * scale[:, None], (b - mean) * scale + beta


def _prep_weights(params):
    """Fold eval-mode BN and all sigmoid affine constants into the weights.

    sigmoid(h) = 0.5*tanh(0.5*h) + 0.5.  The inner 0.5 is folded into the
    current layer's weights; the outer 0.5*t + 0.5 is folded into the NEXT
    layer's weights/bias.  The kernel then computes
        t1 = tanh(W1' x + b1');  t2 = tanh(W2' t1 + b2');  S = exp(W3' t2 + b3')
    which equals the original forward up to f32 reassociation.
    """
    f32 = jnp.float32
    w1f, b1f = _fold_bn(params["w1"].astype(f32), params["b1"].astype(f32),
                        params["g1"].astype(f32), params["be1"].astype(f32),
                        params["m1"].astype(f32), params["v1"].astype(f32))
    w2f, b2f = _fold_bn(params["w2"].astype(f32), params["b2"].astype(f32),
                        params["g2"].astype(f32), params["be2"].astype(f32),
                        params["m2"].astype(f32), params["v2"].astype(f32))
    w3 = params["w3"].astype(f32)
    b3 = params["b3"].astype(f32)

    w1p = 0.5 * w1f
    b1p = 0.5 * b1f
    w2p = 0.25 * w2f
    b2p = 0.5 * (b2f + 0.5 * jnp.sum(w2f, axis=1))
    w3p = 0.5 * w3
    b3p = b3 + 0.5 * jnp.sum(w3, axis=1)

    return (w1p, b1p.reshape(-1, 1), w2p, b2p.reshape(-1, 1),
            w3p, b3p.reshape(1, 1))


def s_net_forward(x, params):
    """x: (..., input_size) float32. Returns [S (N, 1), phi (1,)]."""
    f32 = jnp.float32
    hidden, input_size = params["w1"].shape

    x2 = x.reshape(-1, input_size).astype(f32)            # x.view(-1, D)
    n = x2.shape[0]

    w1p, b1c, w2p, b2c, w3p, b3c = _prep_weights(params)

    # Lane-align the batch: pad the tail to a multiple of 128 rows only when
    # ragged (static Python check -> zero cost for already-aligned N).
    n_pad = _round_up(max(n, 1), 128)
    if n_pad != n:
        x2 = jnp.pad(x2, ((0, n_pad - n), (0, 0)))

    # Batch tile: as large as scoped VMEM comfortably allows (CAP), but no
    # larger than ceil(n_pad/2) rounded to 128 so the "parallel" grid has >=2
    # tiles whenever possible (v7x dual-TensorCore sharding).
    CAP = 8192
    tile_n = min(CAP, max(128, _round_up(pl.cdiv(n_pad, 2), 128)))
    grid = (pl.cdiv(n_pad, tile_n),)    # ragged last tile handled by Pallas

    s_t = pl.pallas_call(
        s_net_kernel,
        out_shape=jax.ShapeDtypeStruct((1, n_pad), f32),
        grid_spec=pltpu.PrefetchScalarGridSpec(
            num_scalar_prefetch=0,
            grid=grid,
            in_specs=[
                # x tile streams over the batch grid, untransposed (N, D).
                pl.BlockSpec((tile_n, input_size), lambda i: (i, 0)),
                # Weights/biases: constant index_map -> stay VMEM-resident.
                pl.BlockSpec((hidden, input_size), lambda i: (0, 0)),
                pl.BlockSpec((hidden, 1), lambda i: (0, 0)),
                pl.BlockSpec((hidden, hidden), lambda i: (0, 0)),
                pl.BlockSpec((hidden, 1), lambda i: (0, 0)),
                pl.BlockSpec((1, hidden), lambda i: (0, 0)),
                pl.BlockSpec((1, 1), lambda i: (0, 0)),
            ],
            out_specs=pl.BlockSpec((1, tile_n), lambda i: (0, i)),
        ),
        compiler_params=pltpu.CompilerParams(
            dimension_semantics=("parallel",),
            vmem_limit_bytes=32 * 1024 * 1024,
        ),
    )(x2, w1p, b1c, w2p, b2c, w3p, b3c)

    S = s_t[0, :n].reshape(n, 1)

    # phi is x-independent: square(l4(ones(1))) with l4 bias-free -> w4^2.
    phi = jnp.square(params["w4"].reshape(1).astype(f32))
    return [S, phi]


def init_params(key, input_size, hidden_size):
    """Deterministic parameter init mirroring S_net.__init__ shapes.

    Weights are stored PyTorch-style as (out_features, in_features); BN params
    as (hidden,) vectors (gamma=1, beta=0, running_mean=0, running_var=1).
    """
    k1, k2, k3, kb1, kb2, kb3 = jax.random.split(key, 6)
    f32 = jnp.float32

    def lin(kw, kb, fan_in, fan_out):
        bound = 1.0 / jnp.sqrt(fan_in)
        w = jax.random.uniform(kw, (fan_out, fan_in), f32, -bound, bound)
        b = jax.random.uniform(kb, (fan_out,), f32, -bound, bound)
        return w, b

    w1, b1 = lin(k1, kb1, input_size, hidden_size)
    w2, b2 = lin(k2, kb2, hidden_size, hidden_size)
    w3, b3 = lin(k3, kb3, hidden_size, 1)

    ones_h = jnp.ones((hidden_size,), f32)
    zeros_h = jnp.zeros((hidden_size,), f32)

    return {
        "w1": w1, "b1": b1, "g1": ones_h, "be1": zeros_h, "m1": zeros_h, "v1": ones_h,
        "w2": w2, "b2": b2, "g2": ones_h, "be2": zeros_h, "m2": zeros_h, "v2": ones_h,
        "w3": w3, "b3": b3,
        # torch.nn.init.uniform_(l4.weight, a=1.4, b=1.40000001) -> ~1.4
        "w4": jnp.full((1, 1), 1.4, f32),
    }


def _ref_forward(x2, p):
    """Pure-JAX eval-mode reference (unfused BN + true sigmoid)."""
    def bn(h, g, be, m, v):
        return (h - m) * jax.lax.rsqrt(v + BN_EPS) * g + be
    h = jax.nn.sigmoid(bn(x2 @ p["w1"].T + p["b1"], p["g1"], p["be1"], p["m1"], p["v1"]))
    h = jax.nn.sigmoid(bn(h @ p["w2"].T + p["b2"], p["g2"], p["be2"], p["m2"], p["v2"]))
    return jnp.exp(h @ p["w3"].T + p["b3"])


if __name__ == "__main__":
    input_size = 16
    hidden_size = 32
    batch = 8

    key = jax.random.PRNGKey(0)
    kx, kp, kx2 = jax.random.split(key, 3)
    x = jax.random.normal(kx, (batch, input_size), jnp.float32)
    params = init_params(kp, input_size, hidden_size)

    S, phi = s_net_forward(x, params)
    jax.block_until_ready(S)
    jax.block_until_ready(phi)

    assert S.shape == (batch, 1) and phi.shape == (1,)
    assert bool(jnp.isfinite(S).all()) and abs(float(phi[0]) - 1.96) < 1e-4

    S_ref = _ref_forward(x.reshape(-1, input_size), params)
    assert bool(jnp.allclose(S, S_ref, rtol=5e-5, atol=1e-6))

    # Second check: lane-aligned multi-tile path (grid of 2 tiles, no padding).
    x_big = jax.random.normal(kx2, (512, input_size), jnp.float32)
    S_big, _ = s_net_forward(x_big, params)
    jax.block_until_ready(S_big)
    S_big_ref = _ref_forward(x_big, params)
    assert S_big.shape == (512, 1)
    assert bool(jnp.allclose(S_big, S_big_ref, rtol=5e-5, atol=1e-6))

    print("KERNEL_OK")
</pallas_src>

<mosaic_0001>
module attributes {stable_mosaic.version = 11 : i64} {
  func.func @s_net_kernel(%arg0: i32, %arg1: memref<128x16xf32, #tpu.memory_space<vmem>>, %arg2: memref<32x16xf32, #tpu.memory_space<vmem>>, %arg3: memref<32x1xf32, #tpu.memory_space<vmem>>, %arg4: memref<32x32xf32, #tpu.memory_space<vmem>>, %arg5: memref<32x1xf32, #tpu.memory_space<vmem>>, %arg6: memref<1x32xf32, #tpu.memory_space<vmem>>, %arg7: memref<1x1xf32, #tpu.memory_space<vmem>>, %arg8: memref<1x128xf32, #tpu.memory_space<vmem>>) attributes {dimension_semantics = [#tpu.dimension_semantics<parallel>], iteration_bounds = array<i64: 1>, scalar_prefetch = 0 : i64, scratch_operands = 0 : i64, tpu.core_type = #tpu.core_type<tc>, window_params = [{transform_indices = @transform_0, window_bounds = array<i64: 128, 16>}, {pipeline_mode = #tpu.pipeline_mode<synchronous>, transform_indices = @transform_1, window_bounds = array<i64: 32, 16>}, {pipeline_mode = #tpu.pipeline_mode<synchronous>, transform_indices = @transform_2, window_bounds = array<i64: 32, 1>}, {pipeline_mode = #tpu.pipeline_mode<synchronous>, transform_indices = @transform_3, window_bounds = array<i64: 32, 32>}, {pipeline_mode = #tpu.pipeline_mode<synchronous>, transform_indices = @transform_4, window_bounds = array<i64: 32, 1>}, {pipeline_mode = #tpu.pipeline_mode<synchronous>, transform_indices = @transform_5, window_bounds = array<i64: 1, 32>}, {pipeline_mode = #tpu.pipeline_mode<synchronous>, transform_indices = @transform_6, window_bounds = array<i64: 1, 1>}, {transform_indices = @transform_7, window_bounds = array<i64: 1, 128>}]} {
    %c0 = arith.constant 0 : index
    %c0_0 = arith.constant 0 : index
    %0 = vector.load %arg2[%c0, %c0_0] : memref<32x16xf32, #tpu.memory_space<vmem>>, vector<32x16xf32>
    %c0_1 = arith.constant 0 : index
    %c0_2 = arith.constant 0 : index
    %1 = vector.load %arg1[%c0_1, %c0_2] : memref<128x16xf32, #tpu.memory_space<vmem>>, vector<128x16xf32>
    "tpu.trace_start"() <{level = 10 : i32, message = "hd,td->ht"}> : () -> ()
    %cst = arith.constant dense<0.000000e+00> : vector<32x128xf32>
    %2 = tpu.matmul %0, %1, %cst {dimension_numbers = #tpu.dot_dimension_numbers<[1], [1], [0], [0], [0, 0, 1, 0], [], []>} : vector<32x16xf32>, vector<128x16xf32>, vector<32x128xf32> -> vector<32x128xf32>
    "tpu.trace_stop"() : () -> ()
    %c0_3 = arith.constant 0 : index
    %c0_4 = arith.constant 0 : index
    %3 = vector.load %arg3[%c0_3, %c0_4] : memref<32x1xf32, #tpu.memory_space<vmem>>, vector<32x1xf32>
    %4 = vector.broadcast %3 : vector<32x1xf32> to vector<32x128xf32>
    %5 = arith.addf %2, %4 : vector<32x128xf32>
    %6 = math.tanh %5 : vector<32x128xf32>
    %c0_5 = arith.constant 0 : index
    %c0_6 = arith.constant 0 : index
    %7 = vector.load %arg4[%c0_5, %c0_6] : memref<32x32xf32, #tpu.memory_space<vmem>>, vector<32x32xf32>
    %cst_7 = arith.constant dense<0.000000e+00> : vector<32x128xf32>
    %8 = tpu.matmul %7, %6, %cst_7 {dimension_numbers = #tpu.dot_dimension_numbers<[1], [0], [0], [1], [0, 0, 1, 1], [], []>} : vector<32x32xf32>, vector<32x128xf32>, vector<32x128xf32> -> vector<32x128xf32>
    %c0_8 = arith.constant 0 : index
    %c0_9 = arith.constant 0 : index
    %9 = vector.load %arg5[%c0_8, %c0_9] : memref<32x1xf32, #tpu.memory_space<vmem>>, vector<32x1xf32>
    %10 = vector.broadcast %9 : vector<32x1xf32> to vector<32x128xf32>
    %11 = arith.addf %8, %10 : vector<32x128xf32>
    %12 = math.tanh %11 : vector<32x128xf32>
    %c0_10 = arith.constant 0 : index
    %c0_11 = arith.constant 0 : index
    %13 = vector.load %arg6[%c0_10, %c0_11] : memref<1x32xf32, #tpu.memory_space<vmem>>, vector<1x32xf32>
    %cst_12 = arith.constant dense<0.000000e+00> : vector<1x128xf32>
    %14 = tpu.matmul %13, %12, %cst_12 {dimension_numbers = #tpu.dot_dimension_numbers<[1], [0], [0], [1], [0, 0, 1, 1], [], []>} : vector<1x32xf32>, vector<32x128xf32>, vector<1x128xf32> -> vector<1x128xf32>
    %c0_13 = arith.constant 0 : index
    %c0_14 = arith.constant 0 : index
    %15 = vector.load %arg7[%c0_13, %c0_14] : memref<1x1xf32, #tpu.memory_space<vmem>>, vector<1x1xf32>
    %16 = vector.broadcast %15 : vector<1x1xf32> to vector<1x128xf32>
    %17 = arith.addf %14, %16 : vector<1x128xf32>
    %18 = math.exp %17 : vector<1x128xf32>
    %c0_15 = arith.constant 0 : index
    %c0_16 = arith.constant 0 : index
    %19 = vector.load %arg8[%c0_15, %c0_16] : memref<1x128xf32, #tpu.memory_space<vmem>>, vector<1x128xf32>
    tpu.vector_store %arg8[%c0_15, %c0_16], %18 {strides = array<i32>} : memref<1x128xf32, #tpu.memory_space<vmem>>, vector<1x128xf32>,
    return
  }
  func.func @transform_0(%arg0: i32) -> (i32, i32) {
    %c0_i32 = arith.constant 0 : i32
    %c0_i32_0 = arith.constant 0 : i32
    return %arg0, %c0_i32 : i32, i32
  }
  func.func @transform_1(%arg0: i32) -> (i32, i32) {
    %c0_i32 = arith.constant 0 : i32
    %c0_i32_0 = arith.constant 0 : i32
    %c0_i32_1 = arith.constant 0 : i32
    return %c0_i32, %c0_i32_0 : i32, i32
  }
  func.func @transform_2(%arg0: i32) -> (i32, i32) {
    %c0_i32 = arith.constant 0 : i32
    %c0_i32_0 = arith.constant 0 : i32
    %c0_i32_1 = arith.constant 0 : i32
    return %c0_i32, %c0_i32_0 : i32, i32
  }
  func.func @transform_3(%arg0: i32) -> (i32, i32) {
    %c0_i32 = arith.constant 0 : i32
    %c0_i32_0 = arith.constant 0 : i32
    %c0_i32_1 = arith.constant 0 : i32
    return %c0_i32, %c0_i32_0 : i32, i32
  }
  func.func @transform_4(%arg0: i32) -> (i32, i32) {
    %c0_i32 = arith.constant 0 : i32
    %c0_i32_0 = arith.constant 0 : i32
    %c0_i32_1 = arith.constant 0 : i32
    return %c0_i32, %c0_i32_0 : i32, i32
  }
  func.func @transform_5(%arg0: i32) -> (i32, i32) {
    %c0_i32 = arith.constant 0 : i32
    %c0_i32_0 = arith.constant 0 : i32
    %c0_i32_1 = arith.constant 0 : i32
    return %c0_i32, %c0_i32_0 : i32, i32
  }
  func.func @transform_6(%arg0: i32) -> (i32, i32) {
    %c0_i32 = arith.constant 0 : i32
    %c0_i32_0 = arith.constant 0 : i32
    %c0_i32_1 = arith.constant 0 : i32
    return %c0_i32, %c0_i32_0 : i32, i32
  }
  func.func @transform_7(%arg0: i32) -> (i32, i32) {
    %c0_i32 = arith.constant 0 : i32
    %c0_i32_0 = arith.constant 0 : i32
    return %c0_i32, %arg0 : i32, i32
  }
}

</mosaic_0001>

<llo_original>
// kernel: tpu_custom_call.1
$region0: #{tpu_custom_call.1}
  #allocation0 [shape = 'u32[]', space=smem, size = 0x4, offset = 0x4, fixed_abs, tag = 'smem constant byte address 0x4 - core index']
  #allocation1 [shape = 'u32[144,128]{1,0:T(1,128)}', space=vmem, size = 0x12000, scoped, tag = 'internal scratch']
  #allocation2 [shape = 'f32[1,1]{1,0:T(1,128)S(1)}', space=vmem, size = 0x200, scoped, tag = 'scoped memory for tpu_custom_call.1']
  %s0 = inlined_call_operand.vmem [shape: f32[128,16], index: 0, kind: input, shape index: {}]
  %s1 = inlined_call_operand.vmem [shape: f32[32,16], index: 1, kind: input, shape index: {}]
  %s2 = inlined_call_operand.vmem [shape: f32[32,1], index: 2, kind: input, shape index: {}]
  %s3 = inlined_call_operand.vmem [shape: f32[32,32], index: 3, kind: input, shape index: {}]
  %s4 = inlined_call_operand.vmem [shape: f32[32,1], index: 4, kind: input, shape index: {}]
  %s5 = inlined_call_operand.vmem [shape: f32[1,32], index: 5, kind: input, shape index: {}]
  %s6 = inlined_call_operand.<no memory space> [shape: f32[1,1], index: 6, kind: input, shape index: {}]
  %s7 = inlined_call_operand.hbm [shape: f32[1,128], index: 7, kind: output, shape index: {}]
  %s8 = sld [smem:[#allocation0]]
  $region38: #{tpu_custom_call.1} parent=0
    _
  %s10 = ssub.s32 1, %s8
  %s11 = scalar_select 0, %s10, %s8
  %v12 = vstv %s6
  %13 = vst [vmem:[#allocation2] sm:$0x1] %v12
  $region1: #{tpu_custom_call.1} parent=0
    #allocation3 [shape = 'u8[512]{0}', space=vmem, size = 0x400, scoped, tag = 'output window, operand 0, single buffered']
    #allocation4 [shape = 's32[1]{0}', space=sflag, size = 0x4, scoped, tag = 'scoped memory for tpu_custom_call.1']
    %14 = vsyncpa [#allocation4], 0
    // Predicated region
    $region2: #{tpu_custom_call.1} parent=1 // pred_check
      _
    $region3: #{tpu_custom_call.1} parent=1 // pred_check_branch
      %16 = sbr.rel (0) target = $region5
    $region4: #{tpu_custom_call.1} parent=1 // pred_region
      _
    $region5: #{tpu_custom_call.1} parent=1 // pred_fallthru
      _
    // Predicated region
    $region6: #{tpu_custom_call.1} parent=1 // pred_check
      _
    $region7: #{tpu_custom_call.1} parent=1 // pred_check_branch
      %18 = sbr.rel (0) target = $region9
    $region8: #{tpu_custom_call.1} parent=1 // pred_region
      _
    $region9: #{tpu_custom_call.1} parent=1 // pred_fallthru
      _
    // Predicated region
    $region10: #{tpu_custom_call.1} parent=1 // pred_check
      _
    $region11: #{tpu_custom_call.1} parent=1 // pred_check_branch
      %20 = sbr.rel (0) target = $region13
    $region12: #{tpu_custom_call.1} parent=1 // pred_region
      _
    $region13: #{tpu_custom_call.1} parent=1 // pred_fallthru
      _
    // Predicated region
    $region14: #{tpu_custom_call.1} parent=1 // pred_check
      _
    $region15: #{tpu_custom_call.1} parent=1 // pred_check_branch
      %22 = sbr.rel (0) target = $region17
    $region16: #{tpu_custom_call.1} parent=1 // pred_region
      _
    $region17: #{tpu_custom_call.1} parent=1 // pred_fallthru
      _
    // Predicated region
    $region18: #{tpu_custom_call.1} parent=1 // pred_check
      _
    $region19: #{tpu_custom_call.1} parent=1 // pred_check_branch
      %24 = sbr.rel (0) target = $region21
    $region20: #{tpu_custom_call.1} parent=1 // pred_region
      _
    $region21: #{tpu_custom_call.1} parent=1 // pred_fallthru
      _
    // Predicated region
    $region22: #{tpu_custom_call.1} parent=1 // pred_check
      _
    $region23: #{tpu_custom_call.1} parent=1 // pred_check_branch
      %26 = sbr.rel (0) target = $region25
    $region24: #{tpu_custom_call.1} parent=1 // pred_region
      _
    $region25: #{tpu_custom_call.1} parent=1 // pred_fallthru
      _
    // Predicated region
    $region26: #{tpu_custom_call.1} parent=1 // pred_check
      _
    $region27: #{tpu_custom_call.1} parent=1 // pred_check_branch
      %28 = sbr.rel (0) target = $region29
    $region28: #{tpu_custom_call.1} parent=1 // pred_region
      _
    $region29: #{tpu_custom_call.1} parent=1 // pred_fallthru
      _
    %v29 = vld [vmem:[%s1] sm:$0xff]
    %v30 = vld [vmem:[%s1 + $0x8] sm:$0xff]
    %v31 = vld [vmem:[%s1 + $0x10] sm:$0xff]
    %v32 = vld [vmem:[%s1 + $0x18] sm:$0xff]
    %v33 = vld [vmem:[%s0] sm:$0xff]
    %v34 = vld [vmem:[%s0 + $0x8] sm:$0xff]
    %v35 = vld [vmem:[%s0 + $0x10] sm:$0xff]
    %v36 = vld [vmem:[%s0 + $0x18] sm:$0xff]
    %v37 = vld [vmem:[%s0 + $0x20] sm:$0xff]
    %v38 = vld [vmem:[%s0 + $0x28] sm:$0xff]
    %v39 = vld [vmem:[%s0 + $0x30] sm:$0xff]
    %v40 = vld [vmem:[%s0 + $0x38] sm:$0xff]
    %v41 = vld [vmem:[%s0 + $0x40] sm:$0xff]
    %v42 = vld [vmem:[%s0 + $0x48] sm:$0xff]
    %v43 = vld [vmem:[%s0 + $0x50] sm:$0xff]
    %v44 = vld [vmem:[%s0 + $0x58] sm:$0xff]
    %v45 = vld [vmem:[%s0 + $0x60] sm:$0xff]
    %v46 = vld [vmem:[%s0 + $0x68] sm:$0xff]
    %v47 = vld [vmem:[%s0 + $0x70] sm:$0xff]
    %v48 = vld [vmem:[%s0 + $0x78] sm:$0xff]
    %v49 = vld [vmem:[%s2] sm:$0xff]
    %v50 = vld [vmem:[%s2 + $0x8] sm:$0xff]
    %v51 = vld [vmem:[%s2 + $0x10] sm:$0xff]
    %v52 = vld [vmem:[%s2 + $0x18] sm:$0xff]
    %54 = vset.pattern.permute.xlu0 0
    %55 = vperm.xlu0 %54, %v49
    %v56 = vpop.permute.xlu0 %55
    %59 = vset.pattern.permute.xlu0 0
    %60 = vperm.xlu0 %59, %v50
    %v61 = vpop.permute.xlu0 %60
    %64 = vset.pattern.permute.xlu0 0
    %65 = vperm.xlu0 %64, %v51
    %v66 = vpop.permute.xlu0 %65
    %69 = vset.pattern.permute.xlu0 0
    %70 = vperm.xlu0 %69, %v52
    %v71 = vpop.permute.xlu0 %70
    %vm73 = vcmask 130048
    %v75 = vsel %vm73, %v29, 0
    %v78 = vsel %vm73, %v30, 0
    %v81 = vsel %vm73, %v31, 0
    %v84 = vsel %vm73, %v32, 0
    %v87 = vsel %vm73, %v33, 0
    %v90 = vsel %vm73, %v34, 0
    %v93 = vsel %vm73, %v35, 0
    %v96 = vsel %vm73, %v36, 0
    %v99 = vsel %vm73, %v37, 0
    %v102 = vsel %vm73, %v38, 0
    %v105 = vsel %vm73, %v39, 0
    %v108 = vsel %vm73, %v40, 0
    %v111 = vsel %vm73, %v41, 0
    %v114 = vsel %vm73, %v42, 0
    %v117 = vsel %vm73, %v43, 0
    %v120 = vsel %vm73, %v44, 0
    %v123 = vsel %vm73, %v45, 0
    %v126 = vsel %vm73, %v46, 0
    %v129 = vsel %vm73, %v47, 0
    %v132 = vsel %vm73, %v48, 0
    %134 = vmatprep.subr.mxu0 0.0
    %135 = vmatpush1.xpose.msra.mxu0 %v87
    %136 = vmatprep.subr.mxu0 0.0
    %137 = vmatpush1.xpose.msra.mxu0 %v90
    %138 = vmatprep.subr.mxu0 0.0
    %139 = vmatpush1.xpose.msra.mxu0 %v93
    %140 = vmatprep.subr.mxu0 0.0
    %141 = vmatpush1.xpose.msra.mxu0 %v96
    %142 = vmatprep.subr.mxu0 0.0
    %143 = vmatpush1.xpose.msra.mxu0 %v99
    %144 = vmatprep.subr.mxu0 0.0
    %145 = vmatpush1.xpose.msra.mxu0 %v102
    %146 = vmatprep.subr.mxu0 0.0
    %147 = vmatpush1.xpose.msra.mxu0 %v105
    %148 = vmatprep.subr.mxu0 0.0
    %149 = vmatpush1.xpose.msra.mxu0 %v108
    %150 = vmatprep.subr.mxu0 0.0
    %151 = vmatpush1.xpose.msra.mxu0 %v111
    %152 = vmatprep.subr.mxu0 0.0
    %153 = vmatpush1.xpose.msra.mxu0 %v114
    %154 = vmatprep.subr.mxu0 0.0
    %155 = vmatpush1.xpose.msra.mxu0 %v117
    %156 = vmatprep.subr.mxu0 0.0
    %157 = vmatpush1.xpose.msra.mxu0 %v120
    %158 = vmatprep.subr.mxu0 0.0
    %159 = vmatpush1.xpose.msra.mxu0 %v123
    %160 = vmatprep.subr.mxu0 0.0
    %161 = vmatpush1.xpose.msra.mxu0 %v126
    %162 = vmatprep.subr.mxu0 0.0
    %163 = vmatpush1.xpose.msra.mxu0 %v129
    %164 = vmatprep.subr.mxu0 0.0
    %165 = vmatpush1.xpose.msra.mxu0 %v132
    %166 = vmatprep.subr.mxu0 0.0
    %167 = vmatpush1.xpose.msra.mxu0 0.0
    %168 = vmatprep.subr.mxu0 0.0
    %169 = vmatpush1.xpose.msra.mxu0 0.0
    %170 = vmatprep.subr.mxu0 0.0
    %171 = vmatpush1.xpose.msra.mxu0 0.0
    %172 = vmatprep.subr.mxu0 0.0
    %173 = vmatpush1.xpose.msra.mxu0 0.0
    %174 = vmatprep.subr.mxu0 0.0
    %175 = vmatpush1.xpose.msra.mxu0 0.0
    %176 = vmatprep.subr.mxu0 0.0
    %177 = vmatpush1.xpose.msra.mxu0 0.0
    %178 = vmatprep.subr.mxu0 0.0
    %179 = vmatpush1.xpose.msra.mxu0 0.0
    %180 = vmatprep.subr.mxu0 0.0
    %181 = vmatpush1.xpose.msra.mxu0 0.0
    %182 = vmatprep.subr.mxu0 0.0
    %183 = vmatpush1.xpose.msra.mxu0 0.0
    %184 = vmatprep.subr.mxu0 0.0
    %185 = vmatpush1.xpose.msra.mxu0 0.0
    %186 = vmatprep.subr.mxu0 0.0
    %187 = vmatpush1.xpose.msra.mxu0 0.0
    %188 = vmatprep.subr.mxu0 0.0
    %189 = vmatpush1.xpose.msra.mxu0 0.0
    %190 = vmatprep.subr.mxu0 0.0
    %191 = vmatpush1.xpose.msra.mxu0 0.0
    %192 = vmatprep.subr.mxu0 0.0
    %193 = vmatpush1.xpose.msra.mxu0 0.0
    %194 = vmatprep.subr.mxu0 0.0
    %195 = vmatpush1.xpose.msra.mxu0 0.0
    %196 = vmatprep.subr.mxu0 0.0
    %197 = vmatpush1.xpose.msra.mxu0 0.0
    %198 = vmatprep.mubr.f32.mxu0 0.0
    %199 = vmatmul.mubr.f32.gmra.mrb[0].mxu0 %v75
    %v200 = vpop.f32.mrb[0].mxu0
    %v201 = vadd.f32 %v56, %v200
    %v202 = vpop.f32.mrb[0].mxu0
    %203 = vmatprep.mubr.f32.mxu0 0.0
    %204 = vmatmul.mubr.f32.gmra.mrb[0].mxu0 %v78
    %v205 = vpop.f32.mrb[0].mxu0
    %v206 = vadd.f32 %v61, %v205
    %v207 = vpop.f32.mrb[0].mxu0
    %208 = vmatprep.mubr.f32.mxu0 0.0
    %209 = vmatmul.mubr.f32.gmra.mrb[0].mxu0 %v81
    %v210 = vpop.f32.mrb[0].mxu0
    %v211 = vadd.f32 %v66, %v210
    %v212 = vpop.f32.mrb[0].mxu0
    %213 = vmatprep.mubr.f32.mxu0 0.0
    %214 = vmatmul.mubr.f32.gmra.mrb[0].mxu0 %v84
    %v215 = vpop.f32.mrb[0].mxu0
    %v216 = vadd.f32 %v71, %v215
    %v217 = vpop.f32.mrb[0].mxu0
    %218 = vdwg.mxu0
    %v219 = vtanh.pop %v201
    %v220 = vtanh.pop %v206
    %v221 = vtanh.pop %v211
    %v222 = vtanh.pop %v216
    %v223 = vld [vmem:[%s3] sm:$0xff]
    %v224 = vld [vmem:[%s3 + $0x8] sm:$0xff]
    %v225 = vld [vmem:[%s3 + $0x10] sm:$0xff]
    %v226 = vld [vmem:[%s3 + $0x18] sm:$0xff]
    %v227 = vld [vmem:[%s4] sm:$0xff]
    %v228 = vld [vmem:[%s4 + $0x8] sm:$0xff]
    %v229 = vld [vmem:[%s4 + $0x10] sm:$0xff]
    %v230 = vld [vmem:[%s4 + $0x18] sm:$0xff]
    %232 = vset.pattern.permute.xlu0 0
    %233 = vperm.xlu0 %232, %v227
    %v234 = vpop.permute.xlu0 %233
    %237 = vset.pattern.permute.xlu0 0
    %238 = vperm.xlu0 %237, %v228
    %v239 = vpop.permute.xlu0 %238
    %242 = vset.pattern.permute.xlu0 0
    %243 = vperm.xlu0 %242, %v229
    %v244 = vpop.permute.xlu0 %243
    %247 = vset.pattern.permute.xlu0 0
    %248 = vperm.xlu0 %247, %v230
    %v249 = vpop.permute.xlu0 %248
    %vm251 = vcmask 261120
    %v253 = vsel %vm251, %v223, 0
    %v256 = vsel %vm251, %v224, 0
    %v259 = vsel %vm251, %v225, 0
    %v262 = vsel %vm251, %v226, 0
    %264 = vmatprep.subr.mxu0 0.0
    %265 = vmatpush1.msra.mxu0 %v219
    %266 = vmatprep.subr.mxu0 0.0
    %267 = vmatpush1.msra.mxu0 %v220
    %268 = vmatprep.subr.mxu0 0.0
    %269 = vmatpush1.msra.mxu0 %v221
    %270 = vmatprep.subr.mxu0 0.0
    %271 = vmatpush1.msra.mxu0 %v222
    %272 = vmatprep.subr.mxu0 0.0
    %273 = vmatpush1.msra.mxu0 0.0
    %274 = vmatprep.subr.mxu0 0.0
    %275 = vmatpush1.msra.mxu0 0.0
    %276 = vmatprep.subr.mxu0 0.0
    %277 = vmatpush1.msra.mxu0 0.0
    %278 = vmatprep.subr.mxu0 0.0
    %279 = vmatpush1.msra.mxu0 0.0
    %280 = vmatprep.subr.mxu0 0.0
    %281 = vmatpush1.msra.mxu0 0.0
    %282 = vmatprep.subr.mxu0 0.0
    %283 = vmatpush1.msra.mxu0 0.0
    %284 = vmatprep.subr.mxu0 0.0
    %285 = vmatpush1.msra.mxu0 0.0
    %286 = vmatprep.subr.mxu0 0.0
    %287 = vmatpush1.msra.mxu0 0.0
    %288 = vmatprep.subr.mxu0 0.0
    %289 = vmatpush1.msra.mxu0 0.0
    %290 = vmatprep.subr.mxu0 0.0
    %291 = vmatpush1.msra.mxu0 0.0
    %292 = vmatprep.subr.mxu0 0.0
    %293 = vmatpush1.msra.mxu0 0.0
    %294 = vmatprep.subr.mxu0 0.0
    %295 = vmatpush1.msra.mxu0 0.0
    %296 = vmatprep.subr.mxu0 0.0
    %297 = vmatpush1.msra.mxu0 0.0
    %298 = vmatprep.subr.mxu0 0.0
    %299 = vmatpush1.msra.mxu0 0.0
    %300 = vmatprep.subr.mxu0 0.0
    %301 = vmatpush1.msra.mxu0 0.0
    %302 = vmatprep.subr.mxu0 0.0
    %303 = vmatpush1.msra.mxu0 0.0
    %304 = vmatprep.subr.mxu0 0.0
    %305 = vmatpush1.msra.mxu0 0.0
    %306 = vmatprep.subr.mxu0 0.0
    %307 = vmatpush1.msra.mxu0 0.0
    %308 = vmatprep.subr.mxu0 0.0
    %309 = vmatpush1.msra.mxu0 0.0
    %310 = vmatprep.subr.mxu0 0.0
    %311 = vmatpush1.msra.mxu0 0.0
    %312 = vmatprep.subr.mxu0 0.0
    %313 = vmatpush1.msra.mxu0 0.0
    %314 = vmatprep.subr.mxu0 0.0
    %315 = vmatpush1.msra.mxu0 0.0
    %316 = vmatprep.subr.mxu0 0.0
    %317 = vmatpush1.msra.mxu0 0.0
    %318 = vmatprep.subr.mxu0 0.0
    %319 = vmatpush1.msra.mxu0 0.0
    %320 = vmatprep.subr.mxu0 0.0
    %321 = vmatpush1.msra.mxu0 0.0
    %322 = vmatprep.subr.mxu0 0.0
    %323 = vmatpush1.msra.mxu0 0.0
    %324 = vmatprep.subr.mxu0 0.0
    %325 = vmatpush1.msra.mxu0 0.0
    %326 = vmatprep.subr.mxu0 0.0
    %327 = vmatpush1.msra.mxu0 0.0
    %328 = vmatprep.mubr.f32.mxu0 0.0
    %329 = vmatmul.mubr.f32.gmra.mrb[0].mxu0 %v253
    %v330 = vpop.f32.mrb[0].mxu0
    %v331 = vadd.f32 %v234, %v330
    %v332 = vpop.f32.mrb[0].mxu0
    %333 = vmatprep.mubr.f32.mxu0 0.0
    %334 = vmatmul.mubr.f32.gmra.mrb[0].mxu0 %v256
    %v335 = vpop.f32.mrb[0].mxu0
    %v336 = vadd.f32 %v239, %v335
    %v337 = vpop.f32.mrb[0].mxu0
    %338 = vmatprep.mubr.f32.mxu0 0.0
    %339 = vmatmul.mubr.f32.gmra.mrb[0].mxu0 %v259
    %v340 = vpop.f32.mrb[0].mxu0
    %v341 = vadd.f32 %v244, %v340
    %v342 = vpop.f32.mrb[0].mxu0
    %343 = vmatprep.mubr.f32.mxu0 0.0
    %344 = vmatmul.mubr.f32.gmra.mrb[0].mxu0 %v262
    %v345 = vpop.f32.mrb[0].mxu0
    %v346 = vadd.f32 %v249, %v345
    %v347 = vpop.f32.mrb[0].mxu0
    %348 = vdwg.mxu0
    %v349 = vtanh.pop %v331
    %v350 = vtanh.pop %v336
    %v351 = vtanh.pop %v341
    %v352 = vtanh.pop %v346
    %v353 = vld [vmem:[%s5] sm:$0x1]
    %v354 = vld [vmem:[#allocation2] sm:$0x1]
    %356 = vset.pattern.permute.xlu0 0
    %357 = vperm.xlu0 %356, %v354
    %v358 = vpop.permute.xlu0 %357
    %v360 = vlaneseq
    %v361 = vshrl.u32 %v360, 7
    %v362 = vsub.s32 0, %v361
    %v363 = vrot.slane %v358, %v362
    %v365 = vsel %vm251, %v353, 0
    %367 = vmatprep.subr.mxu0 0.0
    %368 = vmatpush1.msra.mxu0 %v349
    %369 = vmatprep.subr.mxu0 0.0
    %370 = vmatpush1.msra.mxu0 %v350
    %371 = vmatprep.subr.mxu0 0.0
    %372 = vmatpush1.msra.mxu0 %v351
    %373 = vmatprep.subr.mxu0 0.0
    %374 = vmatpush1.msra.mxu0 %v352
    %375 = vmatprep.subr.mxu0 0.0
    %376 = vmatpush1.msra.mxu0 0.0
    %377 = vmatprep.subr.mxu0 0.0
    %378 = vmatpush1.msra.mxu0 0.0
    %379 = vmatprep.subr.mxu0 0.0
    %380 = vmatpush1.msra.mxu0 0.0
    %381 = vmatprep.subr.mxu0 0.0
    %382 = vmatpush1.msra.mxu0 0.0
    %383 = vmatprep.subr.mxu0 0.0
    %384 = vmatpush1.msra.mxu0 0.0
    %385 = vmatprep.subr.mxu0 0.0
    %386 = vmatpush1.msra.mxu0 0.0
    %387 = vmatprep.subr.mxu0 0.0
    %388 = vmatpush1.msra.mxu0 0.0
    %389 = vmatprep.subr.mxu0 0.0
    %390 = vmatpush1.msra.mxu0 0.0
    %391 = vmatprep.subr.mxu0 0.0
    %392 = vmatpush1.msra.mxu0 0.0
    %393 = vmatprep.subr.mxu0 0.0
    %394 = vmatpush1.msra.mxu0 0.0
    %395 = vmatprep.subr.mxu0 0.0
    %396 = vmatpush1.msra.mxu0 0.0
    %397 = vmatprep.subr.mxu0 0.0
    %398 = vmatpush1.msra.mxu0 0.0
    %399 = vmatprep.subr.mxu0 0.0
    %400 = vmatpush1.msra.mxu0 0.0
    %401 = vmatprep.subr.mxu0 0.0
    %402 = vmatpush1.msra.mxu0 0.0
    %403 = vmatprep.subr.mxu0 0.0
    %404 = vmatpush1.msra.mxu0 0.0
    %405 = vmatprep.subr.mxu0 0.0
    %406 = vmatpush1.msra.mxu0 0.0
    %407 = vmatprep.subr.mxu0 0.0
    %408 = vmatpush1.msra.mxu0 0.0
    %409 = vmatprep.subr.mxu0 0.0
    %410 = vmatpush1.msra.mxu0 0.0
    %411 = vmatprep.subr.mxu0 0.0
    %412 = vmatpush1.msra.mxu0 0.0
    %413 = vmatprep.subr.mxu0 0.0
    %414 = vmatpush1.msra.mxu0 0.0
    %415 = vmatprep.subr.mxu0 0.0
    %416 = vmatpush1.msra.mxu0 0.0
    %417 = vmatprep.subr.mxu0 0.0
    %418 = vmatpush1.msra.mxu0 0.0
    %419 = vmatprep.subr.mxu0 0.0
    %420 = vmatpush1.msra.mxu0 0.0
    %421 = vmatprep.subr.mxu0 0.0
    %422 = vmatpush1.msra.mxu0 0.0
    %423 = vmatprep.subr.mxu0 0.0
    %424 = vmatpush1.msra.mxu0 0.0
    %425 = vmatprep.subr.mxu0 0.0
    %426 = vmatpush1.msra.mxu0 0.0
    %427 = vmatprep.subr.mxu0 0.0
    %428 = vmatpush1.msra.mxu0 0.0
    %429 = vmatprep.subr.mxu0 0.0
    %430 = vmatpush1.msra.mxu0 0.0
    %431 = vmatprep.mubr.f32.mxu0 0.0
    %432 = vmatmul.mubr.f32.gmra.mrb[0].mxu0 %v365
    %v433 = vpop.f32.mrb[0].mxu0
    %v434 = vadd.f32 %v363, %v433
    %v435 = vpop.f32.mrb[0].mxu0
    %436 = vdwg.mxu0
    %v437 = vmul.f32 %v434, 1.442695
    %v438 = vpow.pop %v437
    %439 = vst [vmem:[#allocation3] sm:$0x1] %v438
    // Predicated region
    $region30: #{tpu_custom_call.1} parent=1 // pred_check
      _
    $region31: #{tpu_custom_call.1} parent=1 // pred_check_branch
      %441 = sbr.rel (0) target = $region33
    $region32: #{tpu_custom_call.1} parent=1 // pred_region
      %s443 = ssub.s32 16, 16
      %444 = vsyncadd [#allocation4], %s443
      %s446 = sshll.u32 [#allocation3], 4
      %s447 = int_to_ptr.vmem [resolvable:$true] %s446
      %449 = dma.vmem_to_hbm [thread:$0]  %s447, 16, %s7, [#allocation4]
    $region33: #{tpu_custom_call.1} parent=1 // pred_fallthru
      _
    // Predicated region
    $region34: #{tpu_custom_call.1} parent=1 // pred_check
      _
    $region35: #{tpu_custom_call.1} parent=1 // pred_check_branch
      %451 = sbr.rel (0) target = $region37
    $region36: #{tpu_custom_call.1} parent=1 // pred_region
      %452 = dma.done [#allocation4], 16
    $region37: #{tpu_custom_call.1} parent=1 // pred_fallthru
      _
    %453 = vsyncpa [#allocation4], 1

</llo_original>
